<compile_context>
chip_gen: v7x
topology: tpu7x:2x2x1
jax: 0.10.0
libtpu: 0.0.40
codegen_flags: <defaults>
</compile_context>

<pallas_src>
import jax
import jax.numpy as jnp
from jax.experimental import pallas as pl
from jax.experimental.pallas import tpu as pltpu

IN_DIM = 2        # state dimension
N_ACT = 4         # number of actions (Linear out features)

PAD_K = 8         # contraction dim padded to one sublane group
PAD_N = 128       # action/lane dim padded to one vreg lane width
MAX_M_BLOCK = 256 # largest sublane tile per grid step
NEG_BIG = -1e30   # finite "-inf" baked into the bias padding (avoids NaNs)


def _round_up(x, m):
    return ((x + m - 1) // m) * m


def agent_forward_kernel(x_ref, wt_ref, b_ref, o_ref):
    """probs = softmax(x @ W^T + b); padded lanes carry NEG_BIG via the bias."""
    logits = jnp.dot(x_ref[...], wt_ref[...],
                     preferred_element_type=jnp.float32) + b_ref[...]
    m = jnp.max(logits, axis=-1, keepdims=True)
    e = jnp.exp(logits - m)
    denom = jnp.sum(e, axis=-1, keepdims=True)
    o_ref[...] = e * pl.reciprocal(denom, approx=False)


def make_agent_params(weight, bias):
    """One-time padding of the Linear parameters (hoisted out of the hot path).

    weight: (4, 2) float32 (torch nn.Linear.weight layout)
    bias  : (4,)   float32
    returns (wt_pad, b_pad):
      wt_pad: (PAD_K, PAD_N) rows 0:2 x cols 0:4 hold W^T, rest zero
      b_pad : (1, PAD_N)     lanes 0:4 hold bias, lanes 4: hold NEG_BIG
              (the softmax mask is baked in here, not in the kernel)
    """
    wt_pad = jnp.zeros((PAD_K, PAD_N), jnp.float32)
    wt_pad = wt_pad.at[:IN_DIM, :N_ACT].set(weight.T.astype(jnp.float32))
    b_pad = jnp.full((1, PAD_N), NEG_BIG, dtype=jnp.float32)
    b_pad = b_pad.at[:, :N_ACT].set(bias.astype(jnp.float32))
    return wt_pad, b_pad


@jax.jit
def agent_forward_batched(states_f32, wt_pad, b_pad):
    """softmax(states @ W^T + b) for a batch of agent states.

    states_f32: (B, 2) float32
    returns   : (B, 4) float32 action probabilities
    """
    B = states_f32.shape[0]
    # Adaptive sublane tile: one tile for small batches, 256-row tiles for big.
    m_block = min(MAX_M_BLOCK, _round_up(B, 8))
    Bp = _round_up(B, m_block)
    # Only this tiny (Bp, 8) state block is built per call.
    x_pad = jnp.zeros((Bp, PAD_K), jnp.float32).at[:B, :IN_DIM].set(states_f32)

    out_pad = pl.pallas_call(
        agent_forward_kernel,
        out_shape=jax.ShapeDtypeStruct((Bp, PAD_N), jnp.float32),
        grid=(Bp // m_block,),
        in_specs=[
            pl.BlockSpec((m_block, PAD_K), lambda i: (i, 0)),
            pl.BlockSpec((PAD_K, PAD_N), lambda i: (0, 0)),
            pl.BlockSpec((1, PAD_N), lambda i: (0, 0)),
        ],
        out_specs=pl.BlockSpec((m_block, PAD_N), lambda i: (i, 0)),
        compiler_params=pltpu.CompilerParams(
            dimension_semantics=("parallel",)),
    )(x_pad, wt_pad, b_pad)

    return out_pad[:B, :N_ACT]


def agent_forward(state_f32, wt_pad, b_pad):
    """Single-state forward() matching the PyTorch module (B=1 special case)."""
    return agent_forward_batched(state_f32[None, :], wt_pad, b_pad)[0]


if __name__ == "__main__":
    key = jax.random.PRNGKey(0)
    kw, kb, ks, ks2 = jax.random.split(key, 4)

    # nn.Linear(2, 4) default init: U(-1/sqrt(in), 1/sqrt(in)) for weight & bias.
    bound = 1.0 / (IN_DIM ** 0.5)
    weight = jax.random.uniform(kw, (N_ACT, IN_DIM), jnp.float32, -bound, bound)
    bias = jax.random.uniform(kb, (N_ACT,), jnp.float32, -bound, bound)

    # Hoisted, one-time parameter padding (not in the per-step path).
    wt_pad, b_pad = make_agent_params(weight, bias)

    # --- Single-state forward(), as in the module (state [1, 1] -> .float()) ---
    state = jnp.array([1, 1], dtype=jnp.int32)
    state_f32 = state.astype(jnp.float32)
    probs = jax.block_until_ready(agent_forward(state_f32, wt_pad, b_pad))

    ref = jax.nn.softmax(state_f32 @ weight.T + bias)
    assert probs.shape == (N_ACT,)
    assert jnp.allclose(probs, ref, atol=1e-6), (probs, ref)
    assert jnp.allclose(jnp.sum(probs), 1.0, atol=1e-6)

    # --- Batched forward(): 16 agent states in a 5x5 grid world ---------------
    B = 16
    states = jax.random.randint(ks, (B, IN_DIM), 0, 5, dtype=jnp.int32)
    states_f32_b = states.astype(jnp.float32)
    batch_probs = jax.block_until_ready(
        agent_forward_batched(states_f32_b, wt_pad, b_pad))

    batch_ref = jax.nn.softmax(states_f32_b @ weight.T + bias, axis=-1)
    assert batch_probs.shape == (B, N_ACT)
    assert jnp.allclose(batch_probs, batch_ref, atol=1e-6), (batch_probs, batch_ref)
    assert jnp.allclose(jnp.sum(batch_probs, axis=-1), 1.0, atol=1e-6)

    # --- Larger batch: exercises the multi-block grid path (grid > 1) ---------
    B2 = 300
    states2 = jax.random.randint(ks2, (B2, IN_DIM), 0, 5, dtype=jnp.int32)
    states2_f32 = states2.astype(jnp.float32)
    batch_probs2 = jax.block_until_ready(
        agent_forward_batched(states2_f32, wt_pad, b_pad))

    batch_ref2 = jax.nn.softmax(states2_f32 @ weight.T + bias, axis=-1)
    assert batch_probs2.shape == (B2, N_ACT)
    assert jnp.allclose(batch_probs2, batch_ref2, atol=1e-6)
    assert jnp.allclose(jnp.sum(batch_probs2, axis=-1), 1.0, atol=1e-6)

    # TODO(synk): update_state / sample / get_reward / collect_episode are
    # host-side Python control flow (dict lookups, multinomial sampling), not
    # kernel work.

    print("KERNEL_OK")
</pallas_src>

<mosaic_0001>
module attributes {stable_mosaic.version = 11 : i64} {
  func.func @agent_forward_kernel(%arg0: i32, %arg1: memref<8x8xf32, #tpu.memory_space<vmem>>, %arg2: memref<8x128xf32, #tpu.memory_space<vmem>>, %arg3: memref<1x128xf32, #tpu.memory_space<vmem>>, %arg4: memref<8x128xf32, #tpu.memory_space<vmem>>) attributes {dimension_semantics = [#tpu.dimension_semantics<parallel>], iteration_bounds = array<i64: 1>, scalar_prefetch = 0 : i64, scratch_operands = 0 : i64, tpu.core_type = #tpu.core_type<tc>, window_params = [{transform_indices = @transform_0, window_bounds = array<i64: 8, 8>}, {pipeline_mode = #tpu.pipeline_mode<synchronous>, transform_indices = @transform_1, window_bounds = array<i64: 8, 128>}, {pipeline_mode = #tpu.pipeline_mode<synchronous>, transform_indices = @transform_2, window_bounds = array<i64: 1, 128>}, {transform_indices = @transform_3, window_bounds = array<i64: 8, 128>}]} {
    %c0 = arith.constant 0 : index
    %c0_0 = arith.constant 0 : index
    %0 = vector.load %arg1[%c0, %c0_0] : memref<8x8xf32, #tpu.memory_space<vmem>>, vector<8x8xf32>
    %c0_1 = arith.constant 0 : index
    %c0_2 = arith.constant 0 : index
    %1 = vector.load %arg2[%c0_1, %c0_2] : memref<8x128xf32, #tpu.memory_space<vmem>>, vector<8x128xf32>
    %cst = arith.constant dense<0.000000e+00> : vector<8x128xf32>
    %2 = tpu.matmul %0, %1, %cst {dimension_numbers = #tpu.dot_dimension_numbers<[1], [0], [0], [1], [0, 0, 1, 1], [], []>} : vector<8x8xf32>, vector<8x128xf32>, vector<8x128xf32> -> vector<8x128xf32>
    %c0_3 = arith.constant 0 : index
    %c0_4 = arith.constant 0 : index
    %3 = vector.load %arg3[%c0_3, %c0_4] : memref<1x128xf32, #tpu.memory_space<vmem>>, vector<1x128xf32>
    %4 = vector.broadcast %3 : vector<1x128xf32> to vector<8x128xf32>
    %5 = arith.addf %2, %4 : vector<8x128xf32>
    %cst_5 = arith.constant dense<0xFF800000> : vector<8xf32>
    %6 = vector.multi_reduction <maximumf>, %5, %cst_5 [1] : vector<8x128xf32> to vector<8xf32>
    %7 = vector.shape_cast %6 : vector<8xf32> to vector<8x1xf32>
    %8 = vector.broadcast %7 : vector<8x1xf32> to vector<8x128xf32>
    %9 = arith.subf %5, %8 : vector<8x128xf32>
    %10 = math.exp %9 : vector<8x128xf32>
    %cst_6 = arith.constant dense<0.000000e+00> : vector<8xf32>
    %11 = vector.multi_reduction <add>, %10, %cst_6 [1] : vector<8x128xf32> to vector<8xf32>
    %12 = vector.shape_cast %11 : vector<8xf32> to vector<8x1xf32>
    %13 = tpu.reciprocal %12 : vector<8x1xf32> -> vector<8x1xf32>
    %14 = vector.broadcast %13 : vector<8x1xf32> to vector<8x128xf32>
    %15 = arith.mulf %10, %14 : vector<8x128xf32>
    %c0_7 = arith.constant 0 : index
    %c0_8 = arith.constant 0 : index
    %16 = vector.load %arg4[%c0_7, %c0_8] : memref<8x128xf32, #tpu.memory_space<vmem>>, vector<8x128xf32>
    tpu.vector_store %arg4[%c0_7, %c0_8], %15 {strides = array<i32>} : memref<8x128xf32, #tpu.memory_space<vmem>>, vector<8x128xf32>,
    return
  }
  func.func @transform_0(%arg0: i32) -> (i32, i32) {
    %c0_i32 = arith.constant 0 : i32
    %c0_i32_0 = arith.constant 0 : i32
    return %arg0, %c0_i32 : i32, i32
  }
  func.func @transform_1(%arg0: i32) -> (i32, i32) {
    %c0_i32 = arith.constant 0 : i32
    %c0_i32_0 = arith.constant 0 : i32
    %c0_i32_1 = arith.constant 0 : i32
    return %c0_i32, %c0_i32_0 : i32, i32
  }
  func.func @transform_2(%arg0: i32) -> (i32, i32) {
    %c0_i32 = arith.constant 0 : i32
    %c0_i32_0 = arith.constant 0 : i32
    %c0_i32_1 = arith.constant 0 : i32
    return %c0_i32, %c0_i32_0 : i32, i32
  }
  func.func @transform_3(%arg0: i32) -> (i32, i32) {
    %c0_i32 = arith.constant 0 : i32
    %c0_i32_0 = arith.constant 0 : i32
    return %arg0, %c0_i32 : i32, i32
  }
}

</mosaic_0001>

<llo_original>
// kernel: agent_forward_batched.1
$region0: #{agent_forward_batched.1}
  #allocation0 [shape = 'u32[]', space=smem, size = 0x4, offset = 0x4, fixed_abs, tag = 'smem constant byte address 0x4 - core index']
  #allocation1 [shape = 'u32[144,128]{1,0:T(1,128)}', space=vmem, size = 0x12000, scoped, tag = 'internal scratch']
  %s0 = inlined_call_operand.vmem [shape: f32[8,8], index: 0, kind: input, shape index: {}]
  %s1 = inlined_call_operand.vmem [shape: f32[8,128], index: 1, kind: input, shape index: {}]
  %s2 = inlined_call_operand.vmem [shape: f32[1,128], index: 2, kind: input, shape index: {}]
  %s3 = inlined_call_operand.vmem [shape: f32[8,128], index: 3, kind: output, shape index: {}]
  %s4 = sld [smem:[#allocation0]]
  $region22: #{agent_forward_batched.1} parent=0
    _
  %s6 = ssub.s32 1, %s4
  %s7 = scalar_select 0, %s6, %s4
  // Predicated region
  $region2: #{agent_forward_batched.1} parent=0 // pred_check
    _
  $region3: #{agent_forward_batched.1} parent=0 // pred_check_branch
    %9 = sbr.rel (0) target = $region5
  $region4: #{agent_forward_batched.1} parent=0 // pred_region
    _
  $region5: #{agent_forward_batched.1} parent=0 // pred_fallthru
    _
  // Predicated region
  $region6: #{agent_forward_batched.1} parent=0 // pred_check
    _
  $region7: #{agent_forward_batched.1} parent=0 // pred_check_branch
    %11 = sbr.rel (0) target = $region9
  $region8: #{agent_forward_batched.1} parent=0 // pred_region
    _
  $region9: #{agent_forward_batched.1} parent=0 // pred_fallthru
    _
  // Predicated region
  $region10: #{agent_forward_batched.1} parent=0 // pred_check
    _
  $region11: #{agent_forward_batched.1} parent=0 // pred_check_branch
    %13 = sbr.rel (0) target = $region13
  $region12: #{agent_forward_batched.1} parent=0 // pred_region
    _
  $region13: #{agent_forward_batched.1} parent=0 // pred_fallthru
    _
  %v14 = vld [vmem:[%s0] sm:$0xff]
  %v15 = vld [vmem:[%s1] sm:$0xff]
  %v16 = vld [vmem:[%s2] sm:$0x1]
  %v18 = vlaneseq
  %v19 = vshrl.u32 %v18, 7
  %v20 = vsub.s32 0, %v19
  %v21 = vrot.slane %v16, %v20
  %vm23 = vcmask 64512
  %v25 = vsel %vm23, %v14, 0
  %27 = vmatprep.subr.mxu0 0.0
  %28 = vmatpush1.msra.mxu0 %v15
  %29 = vmatprep.subr.mxu0 0.0
  %30 = vmatpush1.msra.mxu0 0.0
  %31 = vmatprep.subr.mxu0 0.0
  %32 = vmatpush1.msra.mxu0 0.0
  %33 = vmatprep.subr.mxu0 0.0
  %34 = vmatpush1.msra.mxu0 0.0
  %35 = vmatprep.subr.mxu0 0.0
  %36 = vmatpush1.msra.mxu0 0.0
  %37 = vmatprep.subr.mxu0 0.0
  %38 = vmatpush1.msra.mxu0 0.0
  %39 = vmatprep.subr.mxu0 0.0
  %40 = vmatpush1.msra.mxu0 0.0
  %41 = vmatprep.subr.mxu0 0.0
  %42 = vmatpush1.msra.mxu0 0.0
  %43 = vmatprep.subr.mxu0 0.0
  %44 = vmatpush1.msra.mxu0 0.0
  %45 = vmatprep.subr.mxu0 0.0
  %46 = vmatpush1.msra.mxu0 0.0
  %47 = vmatprep.subr.mxu0 0.0
  %48 = vmatpush1.msra.mxu0 0.0
  %49 = vmatprep.subr.mxu0 0.0
  %50 = vmatpush1.msra.mxu0 0.0
  %51 = vmatprep.subr.mxu0 0.0
  %52 = vmatpush1.msra.mxu0 0.0
  %53 = vmatprep.subr.mxu0 0.0
  %54 = vmatpush1.msra.mxu0 0.0
  %55 = vmatprep.subr.mxu0 0.0
  %56 = vmatpush1.msra.mxu0 0.0
  %57 = vmatprep.subr.mxu0 0.0
  %58 = vmatpush1.msra.mxu0 0.0
  %59 = vmatprep.subr.mxu0 0.0
  %60 = vmatpush1.msra.mxu0 0.0
  %61 = vmatprep.subr.mxu0 0.0
  %62 = vmatpush1.msra.mxu0 0.0
  %63 = vmatprep.subr.mxu0 0.0
  %64 = vmatpush1.msra.mxu0 0.0
  %65 = vmatprep.subr.mxu0 0.0
  %66 = vmatpush1.msra.mxu0 0.0
  %67 = vmatprep.subr.mxu0 0.0
  %68 = vmatpush1.msra.mxu0 0.0
  %69 = vmatprep.subr.mxu0 0.0
  %70 = vmatpush1.msra.mxu0 0.0
  %71 = vmatprep.subr.mxu0 0.0
  %72 = vmatpush1.msra.mxu0 0.0
  %73 = vmatprep.subr.mxu0 0.0
  %74 = vmatpush1.msra.mxu0 0.0
  %75 = vmatprep.subr.mxu0 0.0
  %76 = vmatpush1.msra.mxu0 0.0
  %77 = vmatprep.subr.mxu0 0.0
  %78 = vmatpush1.msra.mxu0 0.0
  %79 = vmatprep.subr.mxu0 0.0
  %80 = vmatpush1.msra.mxu0 0.0
  %81 = vmatprep.subr.mxu0 0.0
  %82 = vmatpush1.msra.mxu0 0.0
  %83 = vmatprep.subr.mxu0 0.0
  %84 = vmatpush1.msra.mxu0 0.0
  %85 = vmatprep.subr.mxu0 0.0
  %86 = vmatpush1.msra.mxu0 0.0
  %87 = vmatprep.subr.mxu0 0.0
  %88 = vmatpush1.msra.mxu0 0.0
  %89 = vmatprep.subr.mxu0 0.0
  %90 = vmatpush1.msra.mxu0 0.0
  %91 = vmatprep.mubr.f32.mxu0 0.0
  %92 = vmatmul.mubr.f32.gmra.mrb[0].mxu0 %v25
  %v93 = vpop.f32.mrb[0].mxu0
  %v94 = vadd.f32 %v21, %v93
  %v95 = vpop.f32.mrb[0].mxu0
  %96 = vdwg.mxu0
  %97 = vmax.xlane.f32.xlu0 %v94
  %v98 = vpop.xlane.xlu0 %97
  %v99 = vsub.f32 %v94, %v98
  %v100 = vmul.f32 %v99, 1.442695
  %v101 = vpow.pop %v100
  %102 = vadd.xlane.f32.xlu0 %v101
  %v103 = vpop.xlane.xlu0 %102
  %v104 = vrcp.pop %v103
  %v105 = vmul.f32 %v101, %v104
  %106 = vst [vmem:[%s3] sm:$0xff] %v105
  // Predicated region
  $region14: #{agent_forward_batched.1} parent=0 // pred_check
    _
  $region15: #{agent_forward_batched.1} parent=0 // pred_check_branch
    %108 = sbr.rel (0) target = $region17
  $region16: #{agent_forward_batched.1} parent=0 // pred_region
    _
  $region17: #{agent_forward_batched.1} parent=0 // pred_fallthru
    _
  // Predicated region
  $region18: #{agent_forward_batched.1} parent=0 // pred_check
    _
  $region19: #{agent_forward_batched.1} parent=0 // pred_check_branch
    %110 = sbr.rel (0) target = $region21
  $region20: #{agent_forward_batched.1} parent=0 // pred_region
    _
  $region21: #{agent_forward_batched.1} parent=0 // pred_fallthru
    _

</llo_original>
